<compile_context>
chip_gen: v6e
topology: v6e:2x2x1
jax: 0.10.0
libtpu: 0.0.40
codegen_flags: <defaults>
</compile_context>

<pallas_src>
import math

import jax
import jax.numpy as jnp
from jax.experimental import pallas as pl
from jax.experimental.pallas import tpu as pltpu

D_IN = 256
OUT_REAL = 3          # real output width of the last Linear
OUT_PAD = 8           # zero-padded output width (full-array last dim -> legal block)
_DEFAULT_TILE_B = 4096
_MIN_SPLIT_ROWS = 512  # only force >=2 grid steps above this batch size


def _round_up(n, m):
    return ((n + m - 1) // m) * m


def encoder_kernel(x_ref, w1_ref, b1_ref, w2_ref, b2_ref,
                   w3_ref, b3_ref, w4_ref, b4_ref, o_ref):
    """Fused 4-layer MLP with tanh activations.

    x arrives as f32 and is cast to bf16 in-kernel (rides free VPU slack under
    the DMA); all dots use bf16 operands with f32 accumulation, bias-add and
    tanh run in f32, and intermediates are re-cast to bf16 for the next matmul.
    """
    x = x_ref[...].astype(jnp.bfloat16)
    h = jnp.tanh(
        jnp.dot(x, w1_ref[...], preferred_element_type=jnp.float32) + b1_ref[...]
    )
    h = jnp.tanh(
        jnp.dot(h.astype(jnp.bfloat16), w2_ref[...],
                preferred_element_type=jnp.float32) + b2_ref[...]
    )
    h = jnp.tanh(
        jnp.dot(h.astype(jnp.bfloat16), w3_ref[...],
                preferred_element_type=jnp.float32) + b3_ref[...]
    )
    out = jnp.tanh(
        jnp.dot(h.astype(jnp.bfloat16), w4_ref[...],
                preferred_element_type=jnp.float32) + b4_ref[...]
    )
    o_ref[...] = out.astype(o_ref.dtype)


def prepare_params(params):
    """Call-once (hoisted out of the per-call path): pad the 3-wide last layer
    to OUT_PAD columns and cast weights to bf16 / biases to f32."""
    (w1, b1), (w2, b2), (w3, b3), (w4, b4) = params
    d_out = w4.shape[1]
    w4p = jnp.zeros((w4.shape[0], OUT_PAD), w4.dtype).at[:, :d_out].set(w4)
    b4p = jnp.zeros((1, OUT_PAD), b4.dtype).at[:, :d_out].set(b4)
    ws = tuple(w.astype(jnp.bfloat16) for w in (w1, w2, w3, w4p))
    bs = tuple(b.astype(jnp.float32) for b in (b1, b2, b3, b4p))
    return ws, bs


def _pick_tile(B, tile_b):
    # Shrink for small batches (8-row tiles are fine: x block is f32).
    tile_b = max(8, min(tile_b, _round_up(B, 8)))
    # v7x: keep >=2 grid steps on the parallel axis so both TensorCores work.
    if B >= _MIN_SPLIT_ROWS and pl.cdiv(B, tile_b) < 2:
        tile_b = _round_up(pl.cdiv(B, 2), 8)
    return tile_b


def linear_en_forward(x, prepared_params, *, tile_b=_DEFAULT_TILE_B):
    """x: [B, 256] float32 -> [B, 3] float32."""
    ws, bs = prepared_params
    w1b, w2b, w3b, w4b = ws
    b1f, b2f, b3f, b4f = bs
    B, d_in = x.shape
    assert d_in == D_IN

    tile_b = _pick_tile(B, tile_b)
    # Ragged last block: Pallas masks out-of-bounds output writes, so no
    # jnp.pad round-trip of x through HBM is needed.
    grid = (pl.cdiv(B, tile_b),)

    def rep(arr):
        # Constant block index -> block stays VMEM-resident across grid steps.
        return pl.BlockSpec(arr.shape, lambda i: (0, 0))

    out_padded = pl.pallas_call(
        encoder_kernel,
        out_shape=jax.ShapeDtypeStruct((B, OUT_PAD), jnp.float32),
        grid_spec=pltpu.PrefetchScalarGridSpec(
            num_scalar_prefetch=0,
            grid=grid,
            in_specs=[
                pl.BlockSpec((tile_b, D_IN), lambda i: (i, 0)),  # f32 x tile
                rep(w1b), rep(b1f),
                rep(w2b), rep(b2f),
                rep(w3b), rep(b3f),
                rep(w4b), rep(b4f),
            ],
            out_specs=pl.BlockSpec((tile_b, OUT_PAD), lambda i: (i, 0)),
        ),
        compiler_params=pltpu.CompilerParams(
            dimension_semantics=("parallel",),
            vmem_limit_bytes=48 * 1024 * 1024,  # big-tile headroom; < v7x 64 MiB phys
        ),
    )(x, w1b, b1f, w2b, b2f, w3b, b3f, w4b, b4f)

    return out_padded[:, :OUT_REAL]


def init_params(key):
    """Deterministic init mimicking nn.Linear's U(-1/sqrt(in), 1/sqrt(in)).

    Weights stored as [in, out] (so x @ W + b == PyTorch's x @ W.T + b);
    biases as [1, out] (2-D for TPU layout).
    """
    dims = [(256, 128), (128, 64), (64, 32), (32, 3)]
    params = []
    for (d_in, d_out) in dims:
        key, kw, kb = jax.random.split(key, 3)
        bound = 1.0 / math.sqrt(d_in)
        w = jax.random.uniform(kw, (d_in, d_out), jnp.float32, -bound, bound)
        b = jax.random.uniform(kb, (1, d_out), jnp.float32, -bound, bound)
        params.append((w, b))
    return params


def reference_forward(x, params):
    """Full-f32 reference."""
    h = x
    for (w, b) in params:
        h = jnp.tanh(h @ w + b)
    return h


def reference_forward_bf16(x, params):
    """Reference with the same precision recipe as the kernel
    (bf16 matmul operands, f32 accumulation / bias / tanh)."""
    h = x.astype(jnp.bfloat16)
    out = None
    for (w, b) in params:
        out = jnp.tanh(
            jnp.dot(h, w.astype(jnp.bfloat16),
                    preferred_element_type=jnp.float32)
            + b.astype(jnp.float32)
        )
        h = out.astype(jnp.bfloat16)
    return out


if __name__ == "__main__":
    key = jax.random.PRNGKey(0)
    key, kx, kx2, kx3 = jax.random.split(key, 4)
    params = init_params(key)
    prepped = prepare_params(params)

    # Small batch: single grid step, tile shrinks to the 8-aligned batch.
    B = 16
    x = jax.random.normal(kx, (B, 256), jnp.float32)
    out = jax.block_until_ready(linear_en_forward(x, prepped))
    assert out.shape == (B, 3)
    assert jnp.allclose(out, reference_forward_bf16(x, params),
                        atol=2e-3, rtol=2e-3), "mismatch vs bf16 reference"
    assert jnp.allclose(out, reference_forward(x, params),
                        atol=5e-2, rtol=5e-2), "mismatch vs f32 reference"

    # Non-divisible batch + multi-step grid: exercises the ragged last block.
    B2 = 130
    x2 = jax.random.normal(kx2, (B2, 256), jnp.float32)
    out2 = jax.block_until_ready(linear_en_forward(x2, prepped, tile_b=64))
    assert out2.shape == (B2, 3)
    assert jnp.allclose(out2, reference_forward_bf16(x2, params),
                        atol=2e-3, rtol=2e-3), "mismatch on ragged batch"

    # Tiny batch (< 8 rows): block is partially out-of-bounds in rows.
    B3 = 3
    x3 = jax.random.normal(kx3, (B3, 256), jnp.float32)
    out3 = jax.block_until_ready(linear_en_forward(x3, prepped))
    assert out3.shape == (B3, 3)
    assert jnp.allclose(out3, reference_forward_bf16(x3, params),
                        atol=2e-3, rtol=2e-3), "mismatch on tiny batch"

    print("KERNEL_OK")
</pallas_src>

<mosaic_0001>
module attributes {stable_mosaic.version = 11 : i64} {
  func.func @encoder_kernel(%arg0: i32, %arg1: memref<16x256xf32, #tpu.memory_space<vmem>>, %arg2: memref<256x128xbf16, #tpu.memory_space<vmem>>, %arg3: memref<1x128xf32, #tpu.memory_space<vmem>>, %arg4: memref<128x64xbf16, #tpu.memory_space<vmem>>, %arg5: memref<1x64xf32, #tpu.memory_space<vmem>>, %arg6: memref<64x32xbf16, #tpu.memory_space<vmem>>, %arg7: memref<1x32xf32, #tpu.memory_space<vmem>>, %arg8: memref<32x8xbf16, #tpu.memory_space<vmem>>, %arg9: memref<1x8xf32, #tpu.memory_space<vmem>>, %arg10: memref<16x8xf32, #tpu.memory_space<vmem>>) attributes {dimension_semantics = [#tpu.dimension_semantics<parallel>], iteration_bounds = array<i64: 1>, scalar_prefetch = 0 : i64, scratch_operands = 0 : i64, tpu.core_type = #tpu.core_type<tc>, window_params = [{transform_indices = @transform_0, window_bounds = array<i64: 16, 256>}, {pipeline_mode = #tpu.pipeline_mode<synchronous>, transform_indices = @transform_1, window_bounds = array<i64: 256, 128>}, {pipeline_mode = #tpu.pipeline_mode<synchronous>, transform_indices = @transform_2, window_bounds = array<i64: 1, 128>}, {pipeline_mode = #tpu.pipeline_mode<synchronous>, transform_indices = @transform_3, window_bounds = array<i64: 128, 64>}, {pipeline_mode = #tpu.pipeline_mode<synchronous>, transform_indices = @transform_4, window_bounds = array<i64: 1, 64>}, {pipeline_mode = #tpu.pipeline_mode<synchronous>, transform_indices = @transform_5, window_bounds = array<i64: 64, 32>}, {pipeline_mode = #tpu.pipeline_mode<synchronous>, transform_indices = @transform_6, window_bounds = array<i64: 1, 32>}, {pipeline_mode = #tpu.pipeline_mode<synchronous>, transform_indices = @transform_7, window_bounds = array<i64: 32, 8>}, {pipeline_mode = #tpu.pipeline_mode<synchronous>, transform_indices = @transform_8, window_bounds = array<i64: 1, 8>}, {transform_indices = @transform_9, window_bounds = array<i64: 16, 8>}]} {
    %c0 = arith.constant 0 : index
    %c0_0 = arith.constant 0 : index
    %0 = vector.load %arg1[%c0, %c0_0] : memref<16x256xf32, #tpu.memory_space<vmem>>, vector<16x256xf32>
    %1 = arith.truncf %0 : vector<16x256xf32> to vector<16x256xbf16>
    %c0_1 = arith.constant 0 : index
    %c0_2 = arith.constant 0 : index
    %2 = vector.load %arg2[%c0_1, %c0_2] : memref<256x128xbf16, #tpu.memory_space<vmem>>, vector<256x128xbf16>
    %cst = arith.constant dense<0.000000e+00> : vector<16x128xf32>
    %3 = tpu.matmul %1, %2, %cst {dimension_numbers = #tpu.dot_dimension_numbers<[1], [0], [0], [1], [0, 0, 1, 1], [], []>} : vector<16x256xbf16>, vector<256x128xbf16>, vector<16x128xf32> -> vector<16x128xf32>
    %c0_3 = arith.constant 0 : index
    %c0_4 = arith.constant 0 : index
    %4 = vector.load %arg3[%c0_3, %c0_4] : memref<1x128xf32, #tpu.memory_space<vmem>>, vector<1x128xf32>
    %5 = vector.broadcast %4 : vector<1x128xf32> to vector<16x128xf32>
    %6 = arith.addf %3, %5 : vector<16x128xf32>
    %7 = math.tanh %6 : vector<16x128xf32>
    %8 = arith.truncf %7 : vector<16x128xf32> to vector<16x128xbf16>
    %c0_5 = arith.constant 0 : index
    %c0_6 = arith.constant 0 : index
    %9 = vector.load %arg4[%c0_5, %c0_6] : memref<128x64xbf16, #tpu.memory_space<vmem>>, vector<128x64xbf16>
    %cst_7 = arith.constant dense<0.000000e+00> : vector<16x64xf32>
    %10 = tpu.matmul %8, %9, %cst_7 {dimension_numbers = #tpu.dot_dimension_numbers<[1], [0], [0], [1], [0, 0, 1, 1], [], []>} : vector<16x128xbf16>, vector<128x64xbf16>, vector<16x64xf32> -> vector<16x64xf32>
    %c0_8 = arith.constant 0 : index
    %c0_9 = arith.constant 0 : index
    %11 = vector.load %arg5[%c0_8, %c0_9] : memref<1x64xf32, #tpu.memory_space<vmem>>, vector<1x64xf32>
    %12 = vector.broadcast %11 : vector<1x64xf32> to vector<16x64xf32>
    %13 = arith.addf %10, %12 : vector<16x64xf32>
    %14 = math.tanh %13 : vector<16x64xf32>
    %15 = arith.truncf %14 : vector<16x64xf32> to vector<16x64xbf16>
    %c0_10 = arith.constant 0 : index
    %c0_11 = arith.constant 0 : index
    %16 = vector.load %arg6[%c0_10, %c0_11] : memref<64x32xbf16, #tpu.memory_space<vmem>>, vector<64x32xbf16>
    %cst_12 = arith.constant dense<0.000000e+00> : vector<16x32xf32>
    %17 = tpu.matmul %15, %16, %cst_12 {dimension_numbers = #tpu.dot_dimension_numbers<[1], [0], [0], [1], [0, 0, 1, 1], [], []>} : vector<16x64xbf16>, vector<64x32xbf16>, vector<16x32xf32> -> vector<16x32xf32>
    %c0_13 = arith.constant 0 : index
    %c0_14 = arith.constant 0 : index
    %18 = vector.load %arg7[%c0_13, %c0_14] : memref<1x32xf32, #tpu.memory_space<vmem>>, vector<1x32xf32>
    %19 = vector.broadcast %18 : vector<1x32xf32> to vector<16x32xf32>
    %20 = arith.addf %17, %19 : vector<16x32xf32>
    %21 = math.tanh %20 : vector<16x32xf32>
    %22 = arith.truncf %21 : vector<16x32xf32> to vector<16x32xbf16>
    %c0_15 = arith.constant 0 : index
    %c0_16 = arith.constant 0 : index
    %23 = vector.load %arg8[%c0_15, %c0_16] : memref<32x8xbf16, #tpu.memory_space<vmem>>, vector<32x8xbf16>
    %cst_17 = arith.constant dense<0.000000e+00> : vector<16x8xf32>
    %24 = tpu.matmul %22, %23, %cst_17 {dimension_numbers = #tpu.dot_dimension_numbers<[1], [0], [0], [1], [0, 0, 1, 1], [], []>} : vector<16x32xbf16>, vector<32x8xbf16>, vector<16x8xf32> -> vector<16x8xf32>
    %c0_18 = arith.constant 0 : index
    %c0_19 = arith.constant 0 : index
    %25 = vector.load %arg9[%c0_18, %c0_19] : memref<1x8xf32, #tpu.memory_space<vmem>>, vector<1x8xf32>
    %26 = vector.broadcast %25 : vector<1x8xf32> to vector<16x8xf32>
    %27 = arith.addf %24, %26 : vector<16x8xf32>
    %28 = math.tanh %27 : vector<16x8xf32>
    %c0_20 = arith.constant 0 : index
    %c0_21 = arith.constant 0 : index
    %29 = vector.load %arg10[%c0_20, %c0_21] : memref<16x8xf32, #tpu.memory_space<vmem>>, vector<16x8xf32>
    tpu.vector_store %arg10[%c0_20, %c0_21], %28 {strides = array<i32>} : memref<16x8xf32, #tpu.memory_space<vmem>>, vector<16x8xf32>,
    return
  }
  func.func @transform_0(%arg0: i32) -> (i32, i32) {
    %c0_i32 = arith.constant 0 : i32
    %c0_i32_0 = arith.constant 0 : i32
    return %arg0, %c0_i32 : i32, i32
  }
  func.func @transform_1(%arg0: i32) -> (i32, i32) {
    %c0_i32 = arith.constant 0 : i32
    %c0_i32_0 = arith.constant 0 : i32
    %c0_i32_1 = arith.constant 0 : i32
    return %c0_i32, %c0_i32_0 : i32, i32
  }
  func.func @transform_2(%arg0: i32) -> (i32, i32) {
    %c0_i32 = arith.constant 0 : i32
    %c0_i32_0 = arith.constant 0 : i32
    %c0_i32_1 = arith.constant 0 : i32
    return %c0_i32, %c0_i32_0 : i32, i32
  }
  func.func @transform_3(%arg0: i32) -> (i32, i32) {
    %c0_i32 = arith.constant 0 : i32
    %c0_i32_0 = arith.constant 0 : i32
    %c0_i32_1 = arith.constant 0 : i32
    return %c0_i32, %c0_i32_0 : i32, i32
  }
  func.func @transform_4(%arg0: i32) -> (i32, i32) {
    %c0_i32 = arith.constant 0 : i32
    %c0_i32_0 = arith.constant 0 : i32
    %c0_i32_1 = arith.constant 0 : i32
    return %c0_i32, %c0_i32_0 : i32, i32
  }
  func.func @transform_5(%arg0: i32) -> (i32, i32) {
    %c0_i32 = arith.constant 0 : i32
    %c0_i32_0 = arith.constant 0 : i32
    %c0_i32_1 = arith.constant 0 : i32
    return %c0_i32, %c0_i32_0 : i32, i32
  }
  func.func @transform_6(%arg0: i32) -> (i32, i32) {
    %c0_i32 = arith.constant 0 : i32
    %c0_i32_0 = arith.constant 0 : i32
    %c0_i32_1 = arith.constant 0 : i32
    return %c0_i32, %c0_i32_0 : i32, i32
  }
  func.func @transform_7(%arg0: i32) -> (i32, i32) {
    %c0_i32 = arith.constant 0 : i32
    %c0_i32_0 = arith.constant 0 : i32
    %c0_i32_1 = arith.constant 0 : i32
    return %c0_i32, %c0_i32_0 : i32, i32
  }
  func.func @transform_8(%arg0: i32) -> (i32, i32) {
    %c0_i32 = arith.constant 0 : i32
    %c0_i32_0 = arith.constant 0 : i32
    %c0_i32_1 = arith.constant 0 : i32
    return %c0_i32, %c0_i32_0 : i32, i32
  }
  func.func @transform_9(%arg0: i32) -> (i32, i32) {
    %c0_i32 = arith.constant 0 : i32
    %c0_i32_0 = arith.constant 0 : i32
    return %arg0, %c0_i32 : i32, i32
  }
}

</mosaic_0001>

<llo_original>
// kernel: tpu_custom_call.1
$region0: #{tpu_custom_call.1}
  #allocation0 [shape = 'u32[]', space=smem, size = 0x4, offset = 0x4, fixed_abs, tag = 'smem constant byte address 0x4 - core index']
  #allocation1 [shape = 'u32[144,128]{1,0:T(1,128)}', space=vmem, size = 0x12000, scoped, tag = 'internal scratch']
  %s0 = inlined_call_operand.vmem [shape: f32[16,256], index: 0, kind: input, shape index: {}]
  %s1 = inlined_call_operand.vmem [shape: bf16[256,128], index: 1, kind: input, shape index: {}]
  %s2 = inlined_call_operand.vmem [shape: f32[1,128], index: 2, kind: input, shape index: {}]
  %s3 = inlined_call_operand.vmem [shape: bf16[128,64], index: 3, kind: input, shape index: {}]
  %s4 = inlined_call_operand.vmem [shape: f32[1,64], index: 4, kind: input, shape index: {}]
  %s5 = inlined_call_operand.vmem [shape: bf16[64,32], index: 5, kind: input, shape index: {}]
  %s6 = inlined_call_operand.vmem [shape: f32[1,32], index: 6, kind: input, shape index: {}]
  %s7 = inlined_call_operand.vmem [shape: bf16[32,8], index: 7, kind: input, shape index: {}]
  %s8 = inlined_call_operand.vmem [shape: f32[1,8], index: 8, kind: input, shape index: {}]
  %s9 = inlined_call_operand.vmem [shape: f32[16,8], index: 9, kind: output, shape index: {}]
  %s10 = sld [smem:[#allocation0]]
  $region46: #{tpu_custom_call.1} parent=0
    _
  %s12 = ssub.s32 1, %s10
  %s13 = scalar_select 0, %s12, %s10
  // Predicated region
  $region2: #{tpu_custom_call.1} parent=0 // pred_check
    _
  $region3: #{tpu_custom_call.1} parent=0 // pred_check_branch
    %15 = sbr.rel (0) target = $region5
  $region4: #{tpu_custom_call.1} parent=0 // pred_region
    _
  $region5: #{tpu_custom_call.1} parent=0 // pred_fallthru
    _
  // Predicated region
  $region6: #{tpu_custom_call.1} parent=0 // pred_check
    _
  $region7: #{tpu_custom_call.1} parent=0 // pred_check_branch
    %17 = sbr.rel (0) target = $region9
  $region8: #{tpu_custom_call.1} parent=0 // pred_region
    _
  $region9: #{tpu_custom_call.1} parent=0 // pred_fallthru
    _
  // Predicated region
  $region10: #{tpu_custom_call.1} parent=0 // pred_check
    _
  $region11: #{tpu_custom_call.1} parent=0 // pred_check_branch
    %19 = sbr.rel (0) target = $region13
  $region12: #{tpu_custom_call.1} parent=0 // pred_region
    _
  $region13: #{tpu_custom_call.1} parent=0 // pred_fallthru
    _
  // Predicated region
  $region14: #{tpu_custom_call.1} parent=0 // pred_check
    _
  $region15: #{tpu_custom_call.1} parent=0 // pred_check_branch
    %21 = sbr.rel (0) target = $region17
  $region16: #{tpu_custom_call.1} parent=0 // pred_region
    _
  $region17: #{tpu_custom_call.1} parent=0 // pred_fallthru
    _
  // Predicated region
  $region18: #{tpu_custom_call.1} parent=0 // pred_check
    _
  $region19: #{tpu_custom_call.1} parent=0 // pred_check_branch
    %23 = sbr.rel (0) target = $region21
  $region20: #{tpu_custom_call.1} parent=0 // pred_region
    _
  $region21: #{tpu_custom_call.1} parent=0 // pred_fallthru
    _
  // Predicated region
  $region22: #{tpu_custom_call.1} parent=0 // pred_check
    _
  $region23: #{tpu_custom_call.1} parent=0 // pred_check_branch
    %25 = sbr.rel (0) target = $region25
  $region24: #{tpu_custom_call.1} parent=0 // pred_region
    _
  $region25: #{tpu_custom_call.1} parent=0 // pred_fallthru
    _
  // Predicated region
  $region26: #{tpu_custom_call.1} parent=0 // pred_check
    _
  $region27: #{tpu_custom_call.1} parent=0 // pred_check_branch
    %27 = sbr.rel (0) target = $region29
  $region28: #{tpu_custom_call.1} parent=0 // pred_region
    _
  $region29: #{tpu_custom_call.1} parent=0 // pred_fallthru
    _
  // Predicated region
  $region30: #{tpu_custom_call.1} parent=0 // pred_check
    _
  $region31: #{tpu_custom_call.1} parent=0 // pred_check_branch
    %29 = sbr.rel (0) target = $region33
  $region32: #{tpu_custom_call.1} parent=0 // pred_region
    _
  $region33: #{tpu_custom_call.1} parent=0 // pred_fallthru
    _
  // Predicated region
  $region34: #{tpu_custom_call.1} parent=0 // pred_check
    _
  $region35: #{tpu_custom_call.1} parent=0 // pred_check_branch
    %31 = sbr.rel (0) target = $region37
  $region36: #{tpu_custom_call.1} parent=0 // pred_region
    _
  $region37: #{tpu_custom_call.1} parent=0 // pred_fallthru
    _
  %v33 = vld [vmem:[%s0] sm:$0xff]
  %v34 = vld [vmem:[%s0 + $0x8] sm:$0xff]
  %v35 = vld [vmem:[%s0 + $0x10] sm:$0xff]
  %v36 = vld [vmem:[%s0 + $0x18] sm:$0xff]
  %v37 = vpack.c.bf16 %v35, %v33
  %v38 = vpack.c.bf16 %v36, %v34
  %v39 = vld [vmem:[%s1] sm:$0xf]
  %v40 = vld [vmem:[%s1 + $0x4] sm:$0xf]
  %v41 = vld [vmem:[%s1 + $0x8] sm:$0xf]
  %v42 = vld [vmem:[%s1 + $0xc] sm:$0xf]
  %v43 = vld [vmem:[%s1 + $0x10] sm:$0xf]
  %v44 = vld [vmem:[%s1 + $0x14] sm:$0xf]
  %v45 = vld [vmem:[%s1 + $0x18] sm:$0xf]
  %v46 = vld [vmem:[%s1 + $0x1c] sm:$0xf]
  %v47 = vld [vmem:[%s1 + $0x20] sm:$0xf]
  %v48 = vld [vmem:[%s1 + $0x24] sm:$0xf]
  %v49 = vld [vmem:[%s1 + $0x28] sm:$0xf]
  %v50 = vld [vmem:[%s1 + $0x2c] sm:$0xf]
  %v51 = vld [vmem:[%s1 + $0x30] sm:$0xf]
  %v52 = vld [vmem:[%s1 + $0x34] sm:$0xf]
  %v53 = vld [vmem:[%s1 + $0x38] sm:$0xf]
  %v54 = vld [vmem:[%s1 + $0x3c] sm:$0xf]
  %v55 = vld [vmem:[%s1 + $0x40] sm:$0xf]
  %v56 = vld [vmem:[%s1 + $0x44] sm:$0xf]
  %v57 = vld [vmem:[%s1 + $0x48] sm:$0xf]
  %v58 = vld [vmem:[%s1 + $0x4c] sm:$0xf]
  %v59 = vld [vmem:[%s1 + $0x50] sm:$0xf]
  %v60 = vld [vmem:[%s1 + $0x54] sm:$0xf]
  %v61 = vld [vmem:[%s1 + $0x58] sm:$0xf]
  %v62 = vld [vmem:[%s1 + $0x5c] sm:$0xf]
  %v63 = vld [vmem:[%s1 + $0x60] sm:$0xf]
  %v64 = vld [vmem:[%s1 + $0x64] sm:$0xf]
  %v65 = vld [vmem:[%s1 + $0x68] sm:$0xf]
  %v66 = vld [vmem:[%s1 + $0x6c] sm:$0xf]
  %v67 = vld [vmem:[%s1 + $0x70] sm:$0xf]
  %v68 = vld [vmem:[%s1 + $0x74] sm:$0xf]
  %v69 = vld [vmem:[%s1 + $0x78] sm:$0xf]
  %v70 = vld [vmem:[%s1 + $0x7c] sm:$0xf]
  %v71 = vld [vmem:[%s2] sm:$0x1]
  %v73 = vlaneseq
  %v74 = vshrl.u32 %v73, 7
  %v75 = vsub.s32 0, %v74
  %v76 = vrot.slane %v71, %v75
  %v110 = vunpack.c.l.b16 %v39
  %v111 = vunpack.c.l.b16 %v40
  %v112 = vunpack.c.l.b16 %v41
  %v113 = vunpack.c.l.b16 %v42
  %v114 = vunpack.c.l.b16 %v43
  %v115 = vunpack.c.l.b16 %v44
  %v116 = vunpack.c.l.b16 %v45
  %v117 = vunpack.c.l.b16 %v46
  %v118 = vunpack.c.l.b16 %v47
  %v119 = vunpack.c.l.b16 %v48
  %v120 = vunpack.c.l.b16 %v49
  %v121 = vunpack.c.l.b16 %v50
  %v122 = vunpack.c.l.b16 %v51
  %v123 = vunpack.c.l.b16 %v52
  %v124 = vunpack.c.l.b16 %v53
  %v125 = vunpack.c.l.b16 %v54
  %v126 = vunpack.c.l.b16 %v55
  %v127 = vunpack.c.l.b16 %v56
  %v128 = vunpack.c.l.b16 %v57
  %v129 = vunpack.c.l.b16 %v58
  %v130 = vunpack.c.l.b16 %v59
  %v131 = vunpack.c.l.b16 %v60
  %v132 = vunpack.c.l.b16 %v61
  %v133 = vunpack.c.l.b16 %v62
  %v134 = vunpack.c.l.b16 %v63
  %v135 = vunpack.c.l.b16 %v64
  %v136 = vunpack.c.l.b16 %v65
  %v137 = vunpack.c.l.b16 %v66
  %v138 = vunpack.c.l.b16 %v67
  %v139 = vunpack.c.l.b16 %v68
  %v140 = vunpack.c.l.b16 %v69
  %v141 = vunpack.c.l.b16 %v70
  %v142 = vpack.c.b16 %v111, %v110
  %v143 = vpack.c.b16 %v113, %v112
  %v144 = vpack.c.b16 %v115, %v114
  %v145 = vpack.c.b16 %v117, %v116
  %v146 = vpack.c.b16 %v119, %v118
  %v147 = vpack.c.b16 %v121, %v120
  %v148 = vpack.c.b16 %v123, %v122
  %v149 = vpack.c.b16 %v125, %v124
  %v150 = vpack.c.b16 %v127, %v126
  %v151 = vpack.c.b16 %v129, %v128
  %v152 = vpack.c.b16 %v131, %v130
  %v153 = vpack.c.b16 %v133, %v132
  %v154 = vpack.c.b16 %v135, %v134
  %v155 = vpack.c.b16 %v137, %v136
  %v156 = vpack.c.b16 %v139, %v138
  %v157 = vpack.c.b16 %v141, %v140
  %174 = vmatprep.subr.bf16.mxu0 0
  %175 = vmatpush1.bf16.msra.mxu0 %v149
  %176 = vmatprep.subr.bf16.mxu0 0
  %177 = vmatpush1.bf16.msra.mxu0 %v148
  %178 = vmatprep.subr.bf16.mxu0 0
  %179 = vmatpush1.bf16.msra.mxu0 %v147
  %180 = vmatprep.subr.bf16.mxu0 0
  %181 = vmatpush1.bf16.msra.mxu0 %v146
  %182 = vmatprep.subr.bf16.mxu0 0
  %183 = vmatpush1.bf16.msra.mxu0 %v145
  %184 = vmatprep.subr.bf16.mxu0 0
  %185 = vmatpush1.bf16.msra.mxu0 %v144
  %186 = vmatprep.subr.bf16.mxu0 0
  %187 = vmatpush1.bf16.msra.mxu0 %v143
  %188 = vmatprep.subr.bf16.mxu0 0
  %189 = vmatpush1.bf16.msra.mxu0 %v142
  %190 = vmatprep.subr.bf16.mxu0 0
  %191 = vmatpush2.bf16.msra.mxu0 %v157
  %192 = vmatprep.subr.bf16.mxu0 0
  %193 = vmatpush2.bf16.msra.mxu0 %v156
  %194 = vmatprep.subr.bf16.mxu0 0
  %195 = vmatpush2.bf16.msra.mxu0 %v155
  %196 = vmatprep.subr.bf16.mxu0 0
  %197 = vmatpush2.bf16.msra.mxu0 %v154
  %198 = vmatprep.subr.bf16.mxu0 0
  %199 = vmatpush2.bf16.msra.mxu0 %v153
  %200 = vmatprep.subr.bf16.mxu0 0
  %201 = vmatpush2.bf16.msra.mxu0 %v152
  %202 = vmatprep.subr.bf16.mxu0 0
  %203 = vmatpush2.bf16.msra.mxu0 %v151
  %204 = vmatprep.subr.bf16.mxu0 0
  %205 = vmatpush2.bf16.msra.mxu0 %v150
  %206 = vmatprep.mubr.bf16.mxu0 %v38
  %207 = vmatmul.mubr.bf16.gmra.mxu0 %v37
  %v208 = vpop.f32.mrf.mxu0
  %v209 = vadd.f32 %v76, %v208
  %v210 = vpop.f32.mrf.mxu0
  %v211 = vpop.f32.mrf.mxu0
  %v212 = vadd.f32 %v76, %v211
  %v213 = vpop.f32.mrf.mxu0
  %214 = vdwg.mxu0
  %v215 = vtanh.pop %v209
  %v216 = vtanh.pop %v212
  %v217 = vpack.c.bf16 %v216, %v215
  %v218 = vld [vmem:[%s3] sm:$0xf]
  %v219 = vld [vmem:[%s3 + $0x4] sm:$0xf]
  %v220 = vld [vmem:[%s3 + $0x8] sm:$0xf]
  %v221 = vld [vmem:[%s3 + $0xc] sm:$0xf]
  %v222 = vld [vmem:[%s3 + $0x10] sm:$0xf]
  %v223 = vld [vmem:[%s3 + $0x14] sm:$0xf]
  %v224 = vld [vmem:[%s3 + $0x18] sm:$0xf]
  %v225 = vld [vmem:[%s3 + $0x1c] sm:$0xf]
  %v226 = vld [vmem:[%s3 + $0x20] sm:$0xf]
  %v227 = vld [vmem:[%s3 + $0x24] sm:$0xf]
  %v228 = vld [vmem:[%s3 + $0x28] sm:$0xf]
  %v229 = vld [vmem:[%s3 + $0x2c] sm:$0xf]
  %v230 = vld [vmem:[%s3 + $0x30] sm:$0xf]
  %v231 = vld [vmem:[%s3 + $0x34] sm:$0xf]
  %v232 = vld [vmem:[%s3 + $0x38] sm:$0xf]
  %v233 = vld [vmem:[%s3 + $0x3c] sm:$0xf]
  %v234 = vld [vmem:[%s4] sm:$0x1]
  %v236 = vlaneseq
  %v237 = vshrl.u32 %v236, 7
  %v238 = vsub.s32 0, %v237
  %v239 = vrot.slane %v234, %v238
  %v257 = vunpack.c.l.b16 %v218
  %v258 = vunpack.c.l.b16 %v219
  %v259 = vunpack.c.l.b16 %v220
  %v260 = vunpack.c.l.b16 %v221
  %v261 = vunpack.c.l.b16 %v222
  %v262 = vunpack.c.l.b16 %v223
  %v263 = vunpack.c.l.b16 %v224
  %v264 = vunpack.c.l.b16 %v225
  %v265 = vunpack.c.l.b16 %v226
  %v266 = vunpack.c.l.b16 %v227
  %v267 = vunpack.c.l.b16 %v228
  %v268 = vunpack.c.l.b16 %v229
  %v269 = vunpack.c.l.b16 %v230
  %v270 = vunpack.c.l.b16 %v231
  %v271 = vunpack.c.l.b16 %v232
  %v272 = vunpack.c.l.b16 %v233
  %v273 = vpack.c.b16 %v258, %v257
  %v274 = vpack.c.b16 %v260, %v259
  %v275 = vpack.c.b16 %v262, %v261
  %v276 = vpack.c.b16 %v264, %v263
  %v277 = vpack.c.b16 %v266, %v265
  %v278 = vpack.c.b16 %v268, %v267
  %v279 = vpack.c.b16 %v270, %v269
  %v280 = vpack.c.b16 %v272, %v271
  %289 = vmatprep.subr.bf16.mxu0 0
  %290 = vmatpush1.bf16.msra.mxu0 %v280
  %291 = vmatprep.subr.bf16.mxu0 0
  %292 = vmatpush1.bf16.msra.mxu0 %v279
  %293 = vmatprep.subr.bf16.mxu0 0
  %294 = vmatpush1.bf16.msra.mxu0 %v278
  %295 = vmatprep.subr.bf16.mxu0 0
  %296 = vmatpush1.bf16.msra.mxu0 %v277
  %297 = vmatprep.subr.bf16.mxu0 0
  %298 = vmatpush1.bf16.msra.mxu0 %v276
  %299 = vmatprep.subr.bf16.mxu0 0
  %300 = vmatpush1.bf16.msra.mxu0 %v275
  %301 = vmatprep.subr.bf16.mxu0 0
  %302 = vmatpush1.bf16.msra.mxu0 %v274
  %303 = vmatprep.subr.bf16.mxu0 0
  %304 = vmatpush1.bf16.msra.mxu0 %v273
  %305 = vmatprep.subr.bf16.mxu0 0
  %306 = vmatpush2.bf16.msra.mxu0 0
  %307 = vmatprep.subr.bf16.mxu0 0
  %308 = vmatpush2.bf16.msra.mxu0 0
  %309 = vmatprep.subr.bf16.mxu0 0
  %310 = vmatpush2.bf16.msra.mxu0 0
  %311 = vmatprep.subr.bf16.mxu0 0
  %312 = vmatpush2.bf16.msra.mxu0 0
  %313 = vmatprep.subr.bf16.mxu0 0
  %314 = vmatpush2.bf16.msra.mxu0 0
  %315 = vmatprep.subr.bf16.mxu0 0
  %316 = vmatpush2.bf16.msra.mxu0 0
  %317 = vmatprep.subr.bf16.mxu0 0
  %318 = vmatpush2.bf16.msra.mxu0 0
  %319 = vmatprep.subr.bf16.mxu0 0
  %320 = vmatpush2.bf16.msra.mxu0 0
  %321 = vmatprep.mubr.bf16.mxu0 0
  %322 = vmatmul.mubr.bf16.gmra.mxu0 %v217
  %v323 = vpop.f32.mrf.mxu0
  %v324 = vadd.f32 %v239, %v323
  %v325 = vpop.f32.mrf.mxu0
  %v326 = vpop.f32.mrf.mxu0
  %v327 = vadd.f32 %v239, %v326
  %v328 = vpop.f32.mrf.mxu0
  %329 = vdwg.mxu0
  %v330 = vtanh.pop %v324
  %v331 = vtanh.pop %v327
  %v332 = vpack.c.bf16 %v331, %v330
  %v333 = vld [vmem:[%s5] sm:$0xf]
  %v334 = vld [vmem:[%s5 + $0x4] sm:$0xf]
  %v335 = vld [vmem:[%s5 + $0x8] sm:$0xf]
  %v336 = vld [vmem:[%s5 + $0xc] sm:$0xf]
  %v337 = vld [vmem:[%s5 + $0x10] sm:$0xf]
  %v338 = vld [vmem:[%s5 + $0x14] sm:$0xf]
  %v339 = vld [vmem:[%s5 + $0x18] sm:$0xf]
  %v340 = vld [vmem:[%s5 + $0x1c] sm:$0xf]
  %v341 = vld [vmem:[%s6] sm:$0x1]
  %v343 = vlaneseq
  %v344 = vshrl.u32 %v343, 7
  %v345 = vsub.s32 0, %v344
  %v346 = vrot.slane %v341, %v345
  %v356 = vunpack.c.l.b16 %v333
  %v357 = vunpack.c.l.b16 %v334
  %v358 = vunpack.c.l.b16 %v335
  %v359 = vunpack.c.l.b16 %v336
  %v360 = vunpack.c.l.b16 %v337
  %v361 = vunpack.c.l.b16 %v338
  %v362 = vunpack.c.l.b16 %v339
  %v363 = vunpack.c.l.b16 %v340
  %v364 = vpack.c.b16 %v357, %v356
  %v365 = vpack.c.b16 %v359, %v358
  %v366 = vpack.c.b16 %v361, %v360
  %v367 = vpack.c.b16 %v363, %v362
  %vm372 = vcmask 523264
  %v374 = vsel %vm372, %v332, 0
  %376 = vmatprep.subr.bf16.mxu0 0
  %377 = vmatpush1.bf16.msra.mxu0 0
  %378 = vmatprep.subr.bf16.mxu0 0
  %379 = vmatpush1.bf16.msra.mxu0 0
  %380 = vmatprep.subr.bf16.mxu0 0
  %381 = vmatpush1.bf16.msra.mxu0 0
  %382 = vmatprep.subr.bf16.mxu0 0
  %383 = vmatpush1.bf16.msra.mxu0 0
  %384 = vmatprep.subr.bf16.mxu0 0
  %385 = vmatpush1.bf16.msra.mxu0 %v367
  %386 = vmatprep.subr.bf16.mxu0 0
  %387 = vmatpush1.bf16.msra.mxu0 %v366
  %388 = vmatprep.subr.bf16.mxu0 0
  %389 = vmatpush1.bf16.msra.mxu0 %v365
  %390 = vmatprep.subr.bf16.mxu0 0
  %391 = vmatpush1.bf16.msra.mxu0 %v364
  %392 = vmatprep.subr.bf16.mxu0 0
  %393 = vmatpush2.bf16.msra.mxu0 0
  %394 = vmatprep.subr.bf16.mxu0 0
  %395 = vmatpush2.bf16.msra.mxu0 0
  %396 = vmatprep.subr.bf16.mxu0 0
  %397 = vmatpush2.bf16.msra.mxu0 0
  %398 = vmatprep.subr.bf16.mxu0 0
  %399 = vmatpush2.bf16.msra.mxu0 0
  %400 = vmatprep.subr.bf16.mxu0 0
  %401 = vmatpush2.bf16.msra.mxu0 0
  %402 = vmatprep.subr.bf16.mxu0 0
  %403 = vmatpush2.bf16.msra.mxu0 0
  %404 = vmatprep.subr.bf16.mxu0 0
  %405 = vmatpush2.bf16.msra.mxu0 0
  %406 = vmatprep.subr.bf16.mxu0 0
  %407 = vmatpush2.bf16.msra.mxu0 0
  %408 = vmatprep.mubr.bf16.mxu0 0
  %409 = vmatmul.mubr.bf16.gmra.mxu0 %v374
  %v410 = vpop.f32.mrf.mxu0
  %v411 = vadd.f32 %v346, %v410
  %v412 = vpop.f32.mrf.mxu0
  %v413 = vpop.f32.mrf.mxu0
  %v414 = vadd.f32 %v346, %v413
  %v415 = vpop.f32.mrf.mxu0
  %416 = vdwg.mxu0
  %v417 = vtanh.pop %v411
  %v418 = vtanh.pop %v414
  %v419 = vpack.c.bf16 %v418, %v417
  %v420 = vld [vmem:[%s7] sm:$0xf]
  %v421 = vld [vmem:[%s7 + $0x4] sm:$0xf]
  %v422 = vld [vmem:[%s7 + $0x8] sm:$0xf]
  %v423 = vld [vmem:[%s7 + $0xc] sm:$0xf]
  %v424 = vld [vmem:[%s8] sm:$0x1]
  %v426 = vlaneseq
  %v427 = vshrl.u32 %v426, 7
  %v428 = vsub.s32 0, %v427
  %v429 = vrot.slane %v424, %v428
  %v435 = vunpack.c.l.b16 %v420
  %v436 = vunpack.c.l.b16 %v421
  %v437 = vunpack.c.l.b16 %v422
  %v438 = vunpack.c.l.b16 %v423
  %v439 = vpack.c.b16 %v436, %v435
  %v440 = vpack.c.b16 %v438, %v437
  %vm443 = vcmask 261120
  %v445 = vsel %vm443, %v419, 0
  %447 = vmatprep.subr.bf16.mxu0 0
  %448 = vmatpush1.bf16.msra.mxu0 0
  %449 = vmatprep.subr.bf16.mxu0 0
  %450 = vmatpush1.bf16.msra.mxu0 0
  %451 = vmatprep.subr.bf16.mxu0 0
  %452 = vmatpush1.bf16.msra.mxu0 0
  %453 = vmatprep.subr.bf16.mxu0 0
  %454 = vmatpush1.bf16.msra.mxu0 0
  %455 = vmatprep.subr.bf16.mxu0 0
  %456 = vmatpush1.bf16.msra.mxu0 0
  %457 = vmatprep.subr.bf16.mxu0 0
  %458 = vmatpush1.bf16.msra.mxu0 0
  %459 = vmatprep.subr.bf16.mxu0 0
  %460 = vmatpush1.bf16.msra.mxu0 %v440
  %461 = vmatprep.subr.bf16.mxu0 0
  %462 = vmatpush1.bf16.msra.mxu0 %v439
  %463 = vmatprep.subr.bf16.mxu0 0
  %464 = vmatpush2.bf16.msra.mxu0 0
  %465 = vmatprep.subr.bf16.mxu0 0
  %466 = vmatpush2.bf16.msra.mxu0 0
  %467 = vmatprep.subr.bf16.mxu0 0
  %468 = vmatpush2.bf16.msra.mxu0 0
  %469 = vmatprep.subr.bf16.mxu0 0
  %470 = vmatpush2.bf16.msra.mxu0 0
  %471 = vmatprep.subr.bf16.mxu0 0
  %472 = vmatpush2.bf16.msra.mxu0 0
  %473 = vmatprep.subr.bf16.mxu0 0
  %474 = vmatpush2.bf16.msra.mxu0 0
  %475 = vmatprep.subr.bf16.mxu0 0
  %476 = vmatpush2.bf16.msra.mxu0 0
  %477 = vmatprep.subr.bf16.mxu0 0
  %478 = vmatpush2.bf16.msra.mxu0 0
  %479 = vmatprep.mubr.bf16.mxu0 0
  %480 = vmatmul.mubr.bf16.gmra.mxu0 %v445
  %v481 = vpop.f32.mrf.mxu0
  %v482 = vadd.f32 %v429, %v481
  %v483 = vpop.f32.mrf.mxu0
  %v484 = vpop.f32.mrf.mxu0
  %v485 = vadd.f32 %v429, %v484
  %v486 = vpop.f32.mrf.mxu0
  %487 = vdwg.mxu0
  %v488 = vtanh.pop %v482
  %v489 = vtanh.pop %v485
  %vm490 = vcmask 64512
  %491 = vst.msk [vmem:[%s9] sm:$0xff] %vm490, %v488
  %492 = vst.msk [vmem:[%s9 + $0x8] sm:$0xff] %vm490, %v489
  // Predicated region
  $region38: #{tpu_custom_call.1} parent=0 // pred_check
    _
  $region39: #{tpu_custom_call.1} parent=0 // pred_check_branch
    %494 = sbr.rel (0) target = $region41
  $region40: #{tpu_custom_call.1} parent=0 // pred_region
    _
  $region41: #{tpu_custom_call.1} parent=0 // pred_fallthru
    _
  // Predicated region
  $region42: #{tpu_custom_call.1} parent=0 // pred_check
    _
  $region43: #{tpu_custom_call.1} parent=0 // pred_check_branch
    %496 = sbr.rel (0) target = $region45
  $region44: #{tpu_custom_call.1} parent=0 // pred_region
    _
  $region45: #{tpu_custom_call.1} parent=0 // pred_fallthru
    _

</llo_original>
